<compile_context>
chip_gen: v7x
topology: tpu7x:2x2x1
jax: 0.10.0
libtpu: 0.0.40
codegen_flags: <defaults>
</compile_context>

<pallas_src>
import functools

import jax
import jax.numpy as jnp
from jax.experimental import pallas as pl
from jax.experimental.pallas import tpu as pltpu


def _round_up(x, m):
    return ((x + m - 1) // m) * m


def _cdiv(a, b):
    return (a + b - 1) // b


def _linear_resident_kernel(x_ref, w_ref, b_ref, o_ref):
    # x_ref: (tm, K)   w_ref: (K, N) resident   b_ref: (1, N) f32   o_ref: (tm, N) f32
    acc = jax.lax.dot_general(
        x_ref[...], w_ref[...],
        dimension_numbers=(((1,), (0,)), ((), ())),
        preferred_element_type=jnp.float32,
    )
    o_ref[...] = (acc + b_ref[...]).astype(o_ref.dtype)


def _linear_tiled_kernel(x_ref, w_ref, b_ref, o_ref, *, k_total, tk, mask_k_tail):
    # x_ref: (tm, tk)  w_ref: (tk, tn)  b_ref: (1, tn) f32  o_ref: (tm, tn) f32
    # Output block index is constant across the K grid axis, so o_ref stays
    # VMEM-resident for the whole K loop and doubles as the f32 accumulator.
    k = pl.program_id(2)

    @pl.when(k == 0)
    def _init():
        o_ref[...] = jnp.zeros_like(o_ref)

    x = x_ref[...]
    if mask_k_tail:  # static: only generated when K % tk != 0
        col = jax.lax.broadcasted_iota(jnp.int32, x.shape, 1)
        x = jnp.where(col < (k_total - k * tk), x, jnp.zeros_like(x))

    o_ref[...] += jax.lax.dot_general(
        x, w_ref[...],
        dimension_numbers=(((1,), (0,)), ((), ())),
        preferred_element_type=jnp.float32,
    )

    @pl.when(k == pl.num_programs(2) - 1)
    def _finalize():
        o_ref[...] += b_ref[...]


@functools.partial(
    jax.jit,
    static_argnames=("tm", "tn", "tk", "compute_dtype", "resident_vmem_budget"),
)
def maim_head_l1_forward(
    x, weight, bias, *,
    tm=512, tn=512, tk=512,
    compute_dtype=None,
    resident_vmem_budget=12 * 1024 * 1024,
):
    """Pallas TPU implementation of MAIMHead_L1.forward (nn.Linear).

    x:      (B, S, input_size)
    weight: (output_size, input_size)  -- PyTorch nn.Linear layout
    bias:   (output_size,)
    compute_dtype: optional MXU operand dtype (e.g. jnp.bfloat16 on v6e/v7x);
                   accumulation and output stay float32.
    """
    orig_dtype = x.dtype
    B, S, K = x.shape
    N = weight.shape[0]
    M = B * S

    x2d = x.reshape(M, K)
    # One-time relayout to the MXU-canonical (K, N) form: amortized against the
    # x stream and removes any per-K-step transpose from the hot loop.
    w_t = weight.T
    if compute_dtype is not None:
        x2d = x2d.astype(compute_dtype)
        w_t = w_t.astype(compute_dtype)
    b2d = bias.reshape(1, N).astype(jnp.float32)

    itemsize = jnp.dtype(x2d.dtype).itemsize
    sub = 16 if itemsize == 2 else 8  # sublane granularity for packed dtypes

    # Tile adaptation: keep lane dims 128-aligned; avoid padding waste on small M.
    tm = min(tm, _round_up(M, sub))
    tn = min(tn, _round_up(N, 128))
    tk = min(tk, _round_up(K, 128))

    flops = 2 * M * K * N

    # ---- Path 1: full weight VMEM-resident, grid over M only ------------------
    resident_bytes = (
        2 * tm * K * itemsize      # double-buffered x tiles
        + 2 * tm * N * 4           # double-buffered f32 output tiles
        + 2 * K * N * itemsize     # weight (counted 2x to stay conservative)
        + 2 * N * 4                # bias
    )
    use_resident = resident_bytes <= resident_vmem_budget

    if use_resident:
        grid = (_cdiv(M, tm),)
        out2d = pl.pallas_call(
            _linear_resident_kernel,
            out_shape=jax.ShapeDtypeStruct((M, N), jnp.float32),
            grid_spec=pltpu.PrefetchScalarGridSpec(
                num_scalar_prefetch=0,
                grid=grid,
                in_specs=[
                    pl.BlockSpec((tm, K), lambda i: (i, 0)),   # x tile
                    pl.BlockSpec((K, N), lambda i: (0, 0)),    # resident weight
                    pl.BlockSpec((1, N), lambda i: (0, 0)),    # resident bias
                ],
                out_specs=pl.BlockSpec((tm, N), lambda i: (i, 0)),
            ),
            compiler_params=pltpu.CompilerParams(
                dimension_semantics=("parallel",),
                vmem_limit_bytes=32 * 1024 * 1024,
            ),
            cost_estimate=pl.CostEstimate(
                flops=flops, transcendentals=0,
                bytes_accessed=int(itemsize * (M * K + K * N) + 4 * (N + M * N)),
            ),
        )(x2d, w_t, b2d)
    else:
        # ---- Path 2: (M, N, K) tiled grid, K innermost ------------------------
        grid_m = _cdiv(M, tm)
        grid_n = _cdiv(N, tn)
        # Give both v7x TensorCores / megacore partitions something to do.
        if grid_m * grid_n == 1 and tn > 128:
            tn = max(128, _round_up(tn // 2, 128))
            grid_n = _cdiv(N, tn)
        grid_k = _cdiv(K, tk)
        k_pad = grid_k * tk
        if k_pad != K:
            # Zero the weight's K tail (fused with the transpose copy); the x
            # tail is masked in-kernel, so no garbage reaches valid outputs.
            w_t = jnp.pad(w_t, ((0, k_pad - K), (0, 0)))

        kernel = functools.partial(
            _linear_tiled_kernel, k_total=K, tk=tk, mask_k_tail=(K % tk != 0))

        out2d = pl.pallas_call(
            kernel,
            out_shape=jax.ShapeDtypeStruct((M, N), jnp.float32),
            grid_spec=pltpu.PrefetchScalarGridSpec(
                num_scalar_prefetch=0,
                grid=(grid_m, grid_n, grid_k),
                in_specs=[
                    pl.BlockSpec((tm, tk), lambda i, j, k: (i, k)),  # x tile
                    pl.BlockSpec((tk, tn), lambda i, j, k: (k, j)),  # weight (K, N)
                    pl.BlockSpec((1, tn), lambda i, j, k: (0, j)),   # bias tile
                ],
                out_specs=pl.BlockSpec((tm, tn), lambda i, j, k: (i, j)),
            ),
            compiler_params=pltpu.CompilerParams(
                dimension_semantics=("parallel", "parallel", "arbitrary"),
                vmem_limit_bytes=32 * 1024 * 1024,
            ),
            cost_estimate=pl.CostEstimate(
                flops=flops, transcendentals=0,
                bytes_accessed=int(
                    itemsize * (M * K * grid_n + K * N * grid_m)
                    + 4 * (N * grid_m + M * N)),
            ),
        )(x2d, w_t, b2d)

    return out2d.astype(orig_dtype).reshape(B, S, N)


def init_maim_head_params(key, input_size, output_size):
    """Matches MAIMHead_L1._init_weights: N(0, 0.02) weight, zero bias."""
    wkey, _ = jax.random.split(key)
    weight = 0.02 * jax.random.normal(wkey, (output_size, input_size), dtype=jnp.float32)
    bias = jnp.zeros((output_size,), dtype=jnp.float32)
    return weight, bias


# TODO(synk): loss_fn (L1 reconstruction loss) and anneal_weights are training-time
# host logic and are intentionally not implemented as kernels.

if __name__ == "__main__":
    # Shapes consistent with the module: (batch, seq, input_size) -> (batch, seq, output_size)
    batch, seq, input_size, output_size = 2, 8, 32, 64

    key = jax.random.PRNGKey(0)
    kx, kp, kb = jax.random.split(key, 3)
    x = jax.random.normal(kx, (batch, seq, input_size), dtype=jnp.float32)
    weight, bias = init_maim_head_params(kp, input_size, output_size)

    out = jax.block_until_ready(maim_head_l1_forward(x, weight, bias))
    ref = x @ weight.T + bias
    assert out.shape == (batch, seq, output_size)
    assert jnp.allclose(out, ref, atol=1e-5, rtol=1e-5)

    # Non-divisible shapes + nonzero bias (resident-weight path, M edge block).
    x2 = jax.random.normal(kx, (3, 37, 200), dtype=jnp.float32)
    w2, _ = init_maim_head_params(kp, 200, 300)
    b2 = 0.1 * jax.random.normal(kb, (300,), dtype=jnp.float32)
    ref2 = x2 @ w2.T + b2
    out2 = jax.block_until_ready(maim_head_l1_forward(x2, w2, b2))
    assert out2.shape == (3, 37, 300)
    assert jnp.allclose(out2, ref2, atol=1e-4, rtol=1e-4)

    # Force the tiled (M, N, K) path: exercises K-tail masking and N edge blocks.
    out2t = jax.block_until_ready(
        maim_head_l1_forward(x2, w2, b2, resident_vmem_budget=0))
    assert jnp.allclose(out2t, ref2, atol=1e-4, rtol=1e-4)

    # Tiled path with multi-step K accumulation (K=640 -> 2 K-blocks, tail mask).
    x3 = jax.random.normal(kx, (2, 64, 640), dtype=jnp.float32)
    w3, _ = init_maim_head_params(kp, 640, 384)
    b3 = 0.1 * jax.random.normal(kb, (384,), dtype=jnp.float32)
    ref3 = x3 @ w3.T + b3
    out3 = jax.block_until_ready(
        maim_head_l1_forward(x3, w3, b3, resident_vmem_budget=0))
    assert jnp.allclose(out3, ref3, atol=2e-4, rtol=1e-4)

    # bf16-operand fast path (bf16-native MXU on v6e/v7x); f32 accumulation.
    out3_bf16 = jax.block_until_ready(
        maim_head_l1_forward(x3, w3, b3, compute_dtype=jnp.bfloat16))
    assert jnp.allclose(out3_bf16, ref3, atol=5e-2, rtol=5e-2)

    print("KERNEL_OK")
</pallas_src>

<mosaic_0001>
module attributes {stable_mosaic.version = 11 : i64} {
  func.func @_linear_resident_kernel(%arg0: i32, %arg1: memref<16x32xf32, #tpu.memory_space<vmem>>, %arg2: memref<32x64xf32, #tpu.memory_space<vmem>>, %arg3: memref<1x64xf32, #tpu.memory_space<vmem>>, %arg4: memref<16x64xf32, #tpu.memory_space<vmem>>) attributes {dimension_semantics = [#tpu.dimension_semantics<parallel>], iteration_bounds = array<i64: 1>, scalar_prefetch = 0 : i64, scratch_operands = 0 : i64, tpu.core_type = #tpu.core_type<tc>, window_params = [{transform_indices = @transform_0, window_bounds = array<i64: 16, 32>}, {pipeline_mode = #tpu.pipeline_mode<synchronous>, transform_indices = @transform_1, window_bounds = array<i64: 32, 64>}, {pipeline_mode = #tpu.pipeline_mode<synchronous>, transform_indices = @transform_2, window_bounds = array<i64: 1, 64>}, {transform_indices = @transform_3, window_bounds = array<i64: 16, 64>}]} {
    %c0 = arith.constant 0 : index
    %c0_0 = arith.constant 0 : index
    %0 = vector.load %arg1[%c0, %c0_0] : memref<16x32xf32, #tpu.memory_space<vmem>>, vector<16x32xf32>
    %c0_1 = arith.constant 0 : index
    %c0_2 = arith.constant 0 : index
    %1 = vector.load %arg2[%c0_1, %c0_2] : memref<32x64xf32, #tpu.memory_space<vmem>>, vector<32x64xf32>
    %cst = arith.constant dense<0.000000e+00> : vector<16x64xf32>
    %2 = tpu.matmul %0, %1, %cst {dimension_numbers = #tpu.dot_dimension_numbers<[1], [0], [0], [1], [0, 0, 1, 1], [], []>} : vector<16x32xf32>, vector<32x64xf32>, vector<16x64xf32> -> vector<16x64xf32>
    %c0_3 = arith.constant 0 : index
    %c0_4 = arith.constant 0 : index
    %3 = vector.load %arg3[%c0_3, %c0_4] : memref<1x64xf32, #tpu.memory_space<vmem>>, vector<1x64xf32>
    %4 = vector.broadcast %3 : vector<1x64xf32> to vector<16x64xf32>
    %5 = arith.addf %2, %4 : vector<16x64xf32>
    %c0_5 = arith.constant 0 : index
    %c0_6 = arith.constant 0 : index
    %6 = vector.load %arg4[%c0_5, %c0_6] : memref<16x64xf32, #tpu.memory_space<vmem>>, vector<16x64xf32>
    tpu.vector_store %arg4[%c0_5, %c0_6], %5 {strides = array<i32>} : memref<16x64xf32, #tpu.memory_space<vmem>>, vector<16x64xf32>,
    return
  }
  func.func @transform_0(%arg0: i32) -> (i32, i32) {
    %c0_i32 = arith.constant 0 : i32
    %c0_i32_0 = arith.constant 0 : i32
    return %arg0, %c0_i32 : i32, i32
  }
  func.func @transform_1(%arg0: i32) -> (i32, i32) {
    %c0_i32 = arith.constant 0 : i32
    %c0_i32_0 = arith.constant 0 : i32
    %c0_i32_1 = arith.constant 0 : i32
    return %c0_i32, %c0_i32_0 : i32, i32
  }
  func.func @transform_2(%arg0: i32) -> (i32, i32) {
    %c0_i32 = arith.constant 0 : i32
    %c0_i32_0 = arith.constant 0 : i32
    %c0_i32_1 = arith.constant 0 : i32
    return %c0_i32, %c0_i32_0 : i32, i32
  }
  func.func @transform_3(%arg0: i32) -> (i32, i32) {
    %c0_i32 = arith.constant 0 : i32
    %c0_i32_0 = arith.constant 0 : i32
    return %arg0, %c0_i32 : i32, i32
  }
}

</mosaic_0001>

<llo_original>
// kernel: maim_head_l1_forward.1
$region0: #{maim_head_l1_forward.1}
  #allocation0 [shape = 'u32[]', space=smem, size = 0x4, offset = 0x4, fixed_abs, tag = 'smem constant byte address 0x4 - core index']
  #allocation1 [shape = 'u32[144,128]{1,0:T(1,128)}', space=vmem, size = 0x12000, scoped, tag = 'internal scratch']
  %s0 = inlined_call_operand.hbm [shape: f32[16,32], index: 0, kind: input, shape index: {}]
  %s1 = inlined_call_operand.hbm [shape: f32[32,64], index: 1, kind: input, shape index: {}]
  %s2 = inlined_call_operand.vmem [shape: f32[1,64], index: 2, kind: input, shape index: {}]
  %s3 = inlined_call_operand.hbm [shape: f32[16,64], index: 3, kind: output, shape index: {}]
  %s4 = sld [smem:[#allocation0]]
  $region30: #{maim_head_l1_forward.1} parent=0
    _
  %s6 = ssub.s32 1, %s4
  %s7 = scalar_select 0, %s6, %s4
  $region1: #{maim_head_l1_forward.1} parent=0
    #allocation2 [shape = 'u8[8192]{0}', space=vmem, size = 0x2000, scoped, tag = 'input window, operand 0, single buffered']
    #allocation3 [shape = 's32[1]{0}', space=sflag, size = 0x4, scoped, tag = 'scoped memory for maim_head_l1_forward.1']
    #allocation4 [shape = 's32[1]{0}', space=sflag, size = 0x4, scoped, tag = 'scoped memory for maim_head_l1_forward.1']
    #allocation5 [shape = 'u8[16384]{0}', space=vmem, size = 0x4000, scoped, tag = 'input window, operand 1, single buffered']
    #allocation6 [shape = 's32[1]{0}', space=sflag, size = 0x4, scoped, tag = 'scoped memory for maim_head_l1_forward.1']
    #allocation7 [shape = 'u8[8192]{0}', space=vmem, size = 0x2000, scoped, tag = 'output window, operand 0, single buffered']
    %8 = vsyncpa [#allocation3], 0
    %9 = vsyncpa [#allocation6], 0
    %10 = vsyncpa [#allocation4], 0
    // Predicated region
    $region2: #{maim_head_l1_forward.1} parent=1 // pred_check
      _
    $region3: #{maim_head_l1_forward.1} parent=1 // pred_check_branch
      %12 = sbr.rel (0) target = $region5
    $region4: #{maim_head_l1_forward.1} parent=1 // pred_region
      %s14 = ssub.s32 256, 256
      %15 = vsyncadd [#allocation3], %s14
      %s16 = sshll.u32 [#allocation2], 4
      %s17 = int_to_ptr.vmem [resolvable:$true] %s16
      %22 = dma.hbm_to_vmem [thread:$0]  %s0, 256, %s17, [#allocation3], 128, 128, 8
    $region5: #{maim_head_l1_forward.1} parent=1 // pred_fallthru
      _
    // Predicated region
    $region6: #{maim_head_l1_forward.1} parent=1 // pred_check
      _
    $region7: #{maim_head_l1_forward.1} parent=1 // pred_check_branch
      %24 = sbr.rel (0) target = $region9
    $region8: #{maim_head_l1_forward.1} parent=1 // pred_region
      %s26 = ssub.s32 512, 512
      %27 = vsyncadd [#allocation6], %s26
      %s28 = sshll.u32 [#allocation5], 4
      %s29 = int_to_ptr.vmem [resolvable:$true] %s28
      %34 = dma.hbm_to_vmem [thread:$0]  %s1, 512, %s29, [#allocation6], 128, 128, 8
    $region9: #{maim_head_l1_forward.1} parent=1 // pred_fallthru
      _
    // Predicated region
    $region10: #{maim_head_l1_forward.1} parent=1 // pred_check
      _
    $region11: #{maim_head_l1_forward.1} parent=1 // pred_check_branch
      %36 = sbr.rel (0) target = $region13
    $region12: #{maim_head_l1_forward.1} parent=1 // pred_region
      _
    $region13: #{maim_head_l1_forward.1} parent=1 // pred_fallthru
      _
    // Predicated region
    $region14: #{maim_head_l1_forward.1} parent=1 // pred_check
      _
    $region15: #{maim_head_l1_forward.1} parent=1 // pred_check_branch
      %38 = sbr.rel (0) target = $region17
    $region16: #{maim_head_l1_forward.1} parent=1 // pred_region
      %39 = dma.done [#allocation3], 256
    $region17: #{maim_head_l1_forward.1} parent=1 // pred_fallthru
      _
    // Predicated region
    $region18: #{maim_head_l1_forward.1} parent=1 // pred_check
      _
    $region19: #{maim_head_l1_forward.1} parent=1 // pred_check_branch
      %41 = sbr.rel (0) target = $region21
    $region20: #{maim_head_l1_forward.1} parent=1 // pred_region
      %42 = dma.done [#allocation6], 512
    $region21: #{maim_head_l1_forward.1} parent=1 // pred_fallthru
      _
    %v43 = vld [vmem:[#allocation2] sm:$0xff]
    %v44 = vld [vmem:[#allocation2 + $0x8] sm:$0xff]
    %v45 = vld [vmem:[#allocation5] sm:$0xff]
    %v46 = vld [vmem:[#allocation5 + $0x8] sm:$0xff]
    %v47 = vld [vmem:[#allocation5 + $0x10] sm:$0xff]
    %v48 = vld [vmem:[#allocation5 + $0x18] sm:$0xff]
    %v49 = vld [vmem:[%s2] sm:$0x1]
    %v51 = vlaneseq
    %v52 = vshrl.u32 %v51, 7
    %v53 = vsub.s32 0, %v52
    %v54 = vrot.slane %v49, %v53
    %vm56 = vcmask 261120
    %v58 = vsel %vm56, %v43, 0
    %v61 = vsel %vm56, %v44, 0
    %63 = vmatprep.subr.mxu0 0.0
    %64 = vmatpush1.msra.mxu0 %v45
    %65 = vmatprep.subr.mxu0 0.0
    %66 = vmatpush1.msra.mxu0 %v46
    %67 = vmatprep.subr.mxu0 0.0
    %68 = vmatpush1.msra.mxu0 %v47
    %69 = vmatprep.subr.mxu0 0.0
    %70 = vmatpush1.msra.mxu0 %v48
    %71 = vmatprep.subr.mxu0 0.0
    %72 = vmatpush1.msra.mxu0 0.0
    %73 = vmatprep.subr.mxu0 0.0
    %74 = vmatpush1.msra.mxu0 0.0
    %75 = vmatprep.subr.mxu0 0.0
    %76 = vmatpush1.msra.mxu0 0.0
    %77 = vmatprep.subr.mxu0 0.0
    %78 = vmatpush1.msra.mxu0 0.0
    %79 = vmatprep.subr.mxu0 0.0
    %80 = vmatpush1.msra.mxu0 0.0
    %81 = vmatprep.subr.mxu0 0.0
    %82 = vmatpush1.msra.mxu0 0.0
    %83 = vmatprep.subr.mxu0 0.0
    %84 = vmatpush1.msra.mxu0 0.0
    %85 = vmatprep.subr.mxu0 0.0
    %86 = vmatpush1.msra.mxu0 0.0
    %87 = vmatprep.subr.mxu0 0.0
    %88 = vmatpush1.msra.mxu0 0.0
    %89 = vmatprep.subr.mxu0 0.0
    %90 = vmatpush1.msra.mxu0 0.0
    %91 = vmatprep.subr.mxu0 0.0
    %92 = vmatpush1.msra.mxu0 0.0
    %93 = vmatprep.subr.mxu0 0.0
    %94 = vmatpush1.msra.mxu0 0.0
    %95 = vmatprep.subr.mxu0 0.0
    %96 = vmatpush1.msra.mxu0 0.0
    %97 = vmatprep.subr.mxu0 0.0
    %98 = vmatpush1.msra.mxu0 0.0
    %99 = vmatprep.subr.mxu0 0.0
    %100 = vmatpush1.msra.mxu0 0.0
    %101 = vmatprep.subr.mxu0 0.0
    %102 = vmatpush1.msra.mxu0 0.0
    %103 = vmatprep.subr.mxu0 0.0
    %104 = vmatpush1.msra.mxu0 0.0
    %105 = vmatprep.subr.mxu0 0.0
    %106 = vmatpush1.msra.mxu0 0.0
    %107 = vmatprep.subr.mxu0 0.0
    %108 = vmatpush1.msra.mxu0 0.0
    %109 = vmatprep.subr.mxu0 0.0
    %110 = vmatpush1.msra.mxu0 0.0
    %111 = vmatprep.subr.mxu0 0.0
    %112 = vmatpush1.msra.mxu0 0.0
    %113 = vmatprep.subr.mxu0 0.0
    %114 = vmatpush1.msra.mxu0 0.0
    %115 = vmatprep.subr.mxu0 0.0
    %116 = vmatpush1.msra.mxu0 0.0
    %117 = vmatprep.subr.mxu0 0.0
    %118 = vmatpush1.msra.mxu0 0.0
    %119 = vmatprep.subr.mxu0 0.0
    %120 = vmatpush1.msra.mxu0 0.0
    %121 = vmatprep.subr.mxu0 0.0
    %122 = vmatpush1.msra.mxu0 0.0
    %123 = vmatprep.subr.mxu0 0.0
    %124 = vmatpush1.msra.mxu0 0.0
    %125 = vmatprep.subr.mxu0 0.0
    %126 = vmatpush1.msra.mxu0 0.0
    %127 = vmatprep.mubr.f32.mxu0 0.0
    %128 = vmatmul.mubr.f32.gmra.mrb[0].mxu0 %v58
    %v129 = vpop.f32.mrb[0].mxu0
    %v130 = vadd.f32 %v54, %v129
    %v131 = vpop.f32.mrb[0].mxu0
    %132 = vmatprep.mubr.f32.mxu0 0.0
    %133 = vmatmul.mubr.f32.gmra.mrb[0].mxu0 %v61
    %v134 = vpop.f32.mrb[0].mxu0
    %v135 = vadd.f32 %v54, %v134
    %v136 = vpop.f32.mrb[0].mxu0
    %137 = vdwg.mxu0
    %vm138 = vcmask 523264
    %139 = vst.msk [vmem:[#allocation7] sm:$0xff] %vm138, %v130
    %140 = vst.msk [vmem:[#allocation7 + $0x8] sm:$0xff] %vm138, %v135
    // Predicated region
    $region22: #{maim_head_l1_forward.1} parent=1 // pred_check
      _
    $region23: #{maim_head_l1_forward.1} parent=1 // pred_check_branch
      %142 = sbr.rel (0) target = $region25
    $region24: #{maim_head_l1_forward.1} parent=1 // pred_region
      %s144 = ssub.s32 256, 256
      %145 = vsyncadd [#allocation4], %s144
      %s146 = sshll.u32 [#allocation7], 4
      %s147 = int_to_ptr.vmem [resolvable:$true] %s146
      %152 = dma.vmem_to_hbm [thread:$0]  %s147, 256, %s3, [#allocation4], 128, 128, 8
    $region25: #{maim_head_l1_forward.1} parent=1 // pred_fallthru
      _
    // Predicated region
    $region26: #{maim_head_l1_forward.1} parent=1 // pred_check
      _
    $region27: #{maim_head_l1_forward.1} parent=1 // pred_check_branch
      %154 = sbr.rel (0) target = $region29
    $region28: #{maim_head_l1_forward.1} parent=1 // pred_region
      %155 = dma.done [#allocation4], 256
    $region29: #{maim_head_l1_forward.1} parent=1 // pred_fallthru
      _
    %156 = vsyncpa [#allocation3], 1
    %157 = vsyncpa [#allocation6], 1
    %158 = vsyncpa [#allocation4], 1

</llo_original>
